<compile_context>
chip_gen: v7x
topology: tpu7x:2x2x1
jax: 0.10.0
libtpu: 0.0.40
codegen_flags: <defaults>
</compile_context>

<pallas_src>
import functools

import jax
import jax.numpy as jnp
from jax.experimental import pallas as pl
from jax.experimental.pallas import tpu as pltpu

_LANES = 128
_SUBLANES = 8                              # f32 sublane alignment
_TARGET_BLOCK_BYTES = 2 * 1024 * 1024      # ~2 MiB/block -> ~8 MiB double-buffered
_VMEM_LIMIT_BYTES = 32 * 1024 * 1024       # safe on v5e/v6e/v7x


def _choose_block_rows(total_rows: int, row_bytes: int,
                       target_bytes: int = _TARGET_BLOCK_BYTES,
                       align: int = _SUBLANES):
    """Pick (block_rows, padded_rows).

    block_rows is a multiple of `align` (or the full row count for tiny inputs),
    block_rows divides padded_rows, and padded_rows >= total_rows.
    """
    if total_rows <= align:
        # Full-dim block is always legal regardless of alignment.
        return total_rows, total_rows
    target = max(align, (target_bytes // max(row_bytes, 1)) // align * align)
    if target >= total_rows:
        padded = -(-total_rows // align) * align
        return padded, padded
    # Prefer a divisor of total_rows in [target/2, target] (keeps blocks large,
    # no padding copy needed).
    blk = target
    lo = max(align, target // 2)
    while blk >= lo:
        if total_rows % blk == 0:
            return blk, total_rows
        blk -= align
    # Otherwise pad the rows up to a multiple of the target block.
    padded = -(-total_rows // target) * target
    return target, padded


def _lane_dense_kernel(x_ref, d_ref, o_ref, *, inv_n: float, eps: float):
    """x_ref: (blk_rows, 128) lane-dense tile; d_ref: (128,128) 0/1 block-diag."""
    x = x_ref[...].astype(jnp.float32)
    # Segmented sum-of-squares along lanes on the (otherwise idle) MXU.
    # D[i, j] = 1 iff lanes i, j belong to the same N-wide group, so
    # (x*x) @ D puts each group's sum in every lane of that group.
    seg = jnp.dot(x * x, d_ref[...],
                  preferred_element_type=jnp.float32,
                  precision=jax.lax.Precision.HIGHEST)
    inv = jax.lax.rsqrt(seg * inv_n + eps)
    o_ref[...] = (x * inv).astype(o_ref.dtype)


def _rows_kernel(x_ref, o_ref, *, inv_n: float, eps: float):
    """x_ref: (blk_m, N) tile of rows; normalize each row (N >= 128 path)."""
    x = x_ref[...].astype(jnp.float32)
    ms = jnp.sum(x * x, axis=-1, keepdims=True) * inv_n
    o_ref[...] = (x * jax.lax.rsqrt(ms + eps)).astype(o_ref.dtype)


def _rms_norm_lane_dense(x_lane: jax.Array, n: int, eps: float) -> jax.Array:
    """RMS-normalize each contiguous n-element group of a (rows, 128) array."""
    rows, lanes = x_lane.shape
    assert lanes == _LANES and _LANES % n == 0
    row_bytes = _LANES * x_lane.dtype.itemsize
    blk, padded = _choose_block_rows(rows, row_bytes)
    if padded != rows:
        x_lane = jnp.pad(x_lane, ((0, padded - rows), (0, 0)))

    # 128x128 block-diagonal 0/1 segment matrix (built once, stays resident:
    # its block index is constant across the grid).
    seg_id = jnp.arange(_LANES, dtype=jnp.int32) // n
    d = (seg_id[:, None] == seg_id[None, :]).astype(jnp.float32)

    kernel = functools.partial(_lane_dense_kernel,
                               inv_n=1.0 / float(n), eps=float(eps))
    out = pl.pallas_call(
        kernel,
        out_shape=jax.ShapeDtypeStruct((padded, _LANES), x_lane.dtype),
        grid_spec=pl.GridSpec(
            grid=(padded // blk,),
            in_specs=[
                pl.BlockSpec((blk, _LANES), lambda i: (i, 0)),
                pl.BlockSpec((_LANES, _LANES), lambda i: (0, 0)),
            ],
            out_specs=pl.BlockSpec((blk, _LANES), lambda i: (i, 0)),
        ),
        compiler_params=pltpu.CompilerParams(
            dimension_semantics=("parallel",),
            vmem_limit_bytes=_VMEM_LIMIT_BYTES,
        ),
    )(x_lane, d)
    if padded != rows:
        out = out[:rows]
    return out


def _rms_norm_rows(x2d: jax.Array, eps: float) -> jax.Array:
    """RMS-normalize each row of a (M, N) array (used when N >= 128 etc.)."""
    m, n = x2d.shape
    row_bytes = n * x2d.dtype.itemsize
    blk, padded = _choose_block_rows(m, row_bytes)
    if padded != m:
        x2d = jnp.pad(x2d, ((0, padded - m), (0, 0)))

    kernel = functools.partial(_rows_kernel, inv_n=1.0 / float(n), eps=float(eps))
    out = pl.pallas_call(
        kernel,
        out_shape=jax.ShapeDtypeStruct((padded, n), x2d.dtype),
        grid_spec=pl.GridSpec(
            grid=(padded // blk,),
            in_specs=[pl.BlockSpec((blk, n), lambda i: (i, 0))],
            out_specs=pl.BlockSpec((blk, n), lambda i: (i, 0)),
        ),
        compiler_params=pltpu.CompilerParams(
            dimension_semantics=("parallel",),
            vmem_limit_bytes=_VMEM_LIMIT_BYTES,
        ),
    )(x2d)
    if padded != m:
        out = out[:m]
    return out


def model_new_forward(x: jax.Array, eps: float = 1e-5) -> jax.Array:
    """Equivalent of ModelNew.forward / tilelang_rms_norm.

    x: (batch, features, dim1, dim2).  The reference reshapes the contiguous
    buffer to (batch*dim1*dim2, features) WITHOUT transposing, normalizes each
    row, and reshapes back.  jnp.reshape is row-major, so this matches exactly.
    """
    batch, features, dim1, dim2 = x.shape
    n = features
    total = batch * features * dim1 * dim2
    if n < _LANES and _LANES % n == 0 and total % _LANES == 0:
        # Lane-dense path: groups are contiguous chunks of the flat buffer, so
        # view it as (total/128, 128) and do a segmented lane reduction.
        x_lane = jnp.reshape(x, (total // _LANES, _LANES))
        y = _rms_norm_lane_dense(x_lane, n, eps)
    else:
        # Already lane-dense (or irregular N) path: one group per row.
        x2d = jnp.reshape(x, (batch * dim1 * dim2, n))
        y = _rms_norm_rows(x2d, eps)
    return jnp.reshape(y, x.shape)


if __name__ == "__main__":
    eps = 1e-5
    key = jax.random.PRNGKey(0)
    k1, k2 = jax.random.split(key)

    def reference(x, eps):
        b, c, h, w = x.shape
        x2d = jnp.reshape(x, (b * h * w, c)).astype(jnp.float32)
        inv = jax.lax.rsqrt(jnp.mean(x2d * x2d, axis=-1, keepdims=True) + eps)
        return jnp.reshape(x2d * inv, x.shape).astype(x.dtype)

    # Primary small case (lane-dense MXU-segmented path: features < 128).
    x1 = jax.random.normal(k1, (2, 4, 16, 16), dtype=jnp.float32)
    y1 = jax.block_until_ready(model_new_forward(x1, eps))
    assert y1.shape == x1.shape
    assert bool(jnp.allclose(y1, reference(x1, eps), atol=1e-5, rtol=1e-5))

    # Secondary small case (row-block path: features is a multiple of 128).
    x2 = jax.random.normal(k2, (2, 128, 4, 4), dtype=jnp.float32)
    y2 = jax.block_until_ready(model_new_forward(x2, eps))
    assert y2.shape == x2.shape
    assert bool(jnp.allclose(y2, reference(x2, eps), atol=1e-5, rtol=1e-5))

    print("KERNEL_OK")
</pallas_src>

<mosaic_0001>
module attributes {stable_mosaic.version = 11 : i64} {
  func.func @_lane_dense_kernel(%arg0: i32, %arg1: memref<16x128xf32, #tpu.memory_space<vmem>>, %arg2: memref<128x128xf32, #tpu.memory_space<vmem>>, %arg3: memref<16x128xf32, #tpu.memory_space<vmem>>) attributes {dimension_semantics = [#tpu.dimension_semantics<parallel>], iteration_bounds = array<i64: 1>, scalar_prefetch = 0 : i64, scratch_operands = 0 : i64, tpu.core_type = #tpu.core_type<tc>, window_params = [{transform_indices = @transform_0, window_bounds = array<i64: 16, 128>}, {pipeline_mode = #tpu.pipeline_mode<synchronous>, transform_indices = @transform_1, window_bounds = array<i64: 128, 128>}, {transform_indices = @transform_2, window_bounds = array<i64: 16, 128>}]} {
    %c0 = arith.constant 0 : index
    %c0_0 = arith.constant 0 : index
    %0 = vector.load %arg1[%c0, %c0_0] : memref<16x128xf32, #tpu.memory_space<vmem>>, vector<16x128xf32>
    %1 = arith.mulf %0, %0 : vector<16x128xf32>
    %c0_1 = arith.constant 0 : index
    %c0_2 = arith.constant 0 : index
    %2 = vector.load %arg2[%c0_1, %c0_2] : memref<128x128xf32, #tpu.memory_space<vmem>>, vector<128x128xf32>
    %cst = arith.constant dense<0.000000e+00> : vector<16x128xf32>
    %3 = tpu.matmul %1, %2, %cst {dimension_numbers = #tpu.dot_dimension_numbers<[1], [0], [0], [1], [0, 0, 1, 1], [], []>, precision = #tpu.contract_precision<fp32>} : vector<16x128xf32>, vector<128x128xf32>, vector<16x128xf32> -> vector<16x128xf32>
    %cst_3 = arith.constant 2.500000e-01 : f32
    %4 = vector.broadcast %cst_3 : f32 to vector<16x128xf32>
    %5 = arith.mulf %3, %4 : vector<16x128xf32>
    %cst_4 = arith.constant 9.99999974E-6 : f32
    %6 = vector.broadcast %cst_4 : f32 to vector<16x128xf32>
    %7 = arith.addf %5, %6 : vector<16x128xf32>
    %8 = math.rsqrt %7 : vector<16x128xf32>
    %9 = arith.mulf %0, %8 : vector<16x128xf32>
    %c0_5 = arith.constant 0 : index
    %c0_6 = arith.constant 0 : index
    %10 = vector.load %arg3[%c0_5, %c0_6] : memref<16x128xf32, #tpu.memory_space<vmem>>, vector<16x128xf32>
    tpu.vector_store %arg3[%c0_5, %c0_6], %9 {strides = array<i32>} : memref<16x128xf32, #tpu.memory_space<vmem>>, vector<16x128xf32>,
    return
  }
  func.func @transform_0(%arg0: i32) -> (i32, i32) {
    %c0_i32 = arith.constant 0 : i32
    %c0_i32_0 = arith.constant 0 : i32
    return %arg0, %c0_i32 : i32, i32
  }
  func.func @transform_1(%arg0: i32) -> (i32, i32) {
    %c0_i32 = arith.constant 0 : i32
    %c0_i32_0 = arith.constant 0 : i32
    %c0_i32_1 = arith.constant 0 : i32
    return %c0_i32, %c0_i32_0 : i32, i32
  }
  func.func @transform_2(%arg0: i32) -> (i32, i32) {
    %c0_i32 = arith.constant 0 : i32
    %c0_i32_0 = arith.constant 0 : i32
    return %arg0, %c0_i32 : i32, i32
  }
}

</mosaic_0001>

<llo_original>
// kernel: tpu_custom_call.1
$region0: #{tpu_custom_call.1}
  #allocation0 [shape = 'u32[]', space=smem, size = 0x4, offset = 0x4, fixed_abs, tag = 'smem constant byte address 0x4 - core index']
  #allocation1 [shape = 'u32[144,128]{1,0:T(1,128)}', space=vmem, size = 0x12000, scoped, tag = 'internal scratch']
  %s0 = inlined_call_operand.hbm [shape: f32[16,128], index: 0, kind: input, shape index: {}]
  %s1 = inlined_call_operand.hbm [shape: f32[128,128], index: 1, kind: input, shape index: {}]
  %s2 = inlined_call_operand.hbm [shape: f32[16,128], index: 2, kind: output, shape index: {}]
  %s3 = sld [smem:[#allocation0]]
  $region26: #{tpu_custom_call.1} parent=0
    _
  %s5 = ssub.s32 1, %s3
  %s6 = scalar_select 0, %s5, %s3
  $region1: #{tpu_custom_call.1} parent=0
    #allocation2 [shape = 'u8[8192]{0}', space=vmem, size = 0x2000, scoped, tag = 'input window, operand 0, single buffered']
    #allocation3 [shape = 's32[1]{0}', space=sflag, size = 0x4, scoped, tag = 'scoped memory for tpu_custom_call.1']
    #allocation4 [shape = 's32[1]{0}', space=sflag, size = 0x4, scoped, tag = 'scoped memory for tpu_custom_call.1']
    #allocation5 [shape = 'u8[65536]{0}', space=vmem, size = 0x10000, scoped, tag = 'input window, operand 1, single buffered']
    #allocation6 [shape = 's32[1]{0}', space=sflag, size = 0x4, scoped, tag = 'scoped memory for tpu_custom_call.1']
    #allocation7 [shape = 'u8[8192]{0}', space=vmem, size = 0x2000, scoped, tag = 'output window, operand 0, single buffered']
    %7 = vsyncpa [#allocation3], 0
    %8 = vsyncpa [#allocation6], 0
    %9 = vsyncpa [#allocation4], 0
    // Predicated region
    $region2: #{tpu_custom_call.1} parent=1 // pred_check
      _
    $region3: #{tpu_custom_call.1} parent=1 // pred_check_branch
      %11 = sbr.rel (0) target = $region5
    $region4: #{tpu_custom_call.1} parent=1 // pred_region
      %s13 = ssub.s32 256, 256
      %14 = vsyncadd [#allocation3], %s13
      %s15 = sshll.u32 [#allocation2], 4
      %s16 = int_to_ptr.vmem [resolvable:$true] %s15
      %21 = dma.hbm_to_vmem [thread:$0]  %s0, 256, %s16, [#allocation3], 128, 128, 8
    $region5: #{tpu_custom_call.1} parent=1 // pred_fallthru
      _
    // Predicated region
    $region6: #{tpu_custom_call.1} parent=1 // pred_check
      _
    $region7: #{tpu_custom_call.1} parent=1 // pred_check_branch
      %23 = sbr.rel (0) target = $region9
    $region8: #{tpu_custom_call.1} parent=1 // pred_region
      %s25 = ssub.s32 2048, 2048
      %26 = vsyncadd [#allocation6], %s25
      %s27 = sshll.u32 [#allocation5], 4
      %s28 = int_to_ptr.vmem [resolvable:$true] %s27
      %33 = dma.hbm_to_vmem [thread:$0]  %s1, 2048, %s28, [#allocation6], 128, 128, 8
    $region9: #{tpu_custom_call.1} parent=1 // pred_fallthru
      _
    // Predicated region
    $region10: #{tpu_custom_call.1} parent=1 // pred_check
      _
    $region11: #{tpu_custom_call.1} parent=1 // pred_check_branch
      %35 = sbr.rel (0) target = $region13
    $region12: #{tpu_custom_call.1} parent=1 // pred_region
      %36 = dma.done [#allocation3], 256
    $region13: #{tpu_custom_call.1} parent=1 // pred_fallthru
      _
    // Predicated region
    $region14: #{tpu_custom_call.1} parent=1 // pred_check
      _
    $region15: #{tpu_custom_call.1} parent=1 // pred_check_branch
      %38 = sbr.rel (0) target = $region17
    $region16: #{tpu_custom_call.1} parent=1 // pred_region
      %39 = dma.done [#allocation6], 2048
    $region17: #{tpu_custom_call.1} parent=1 // pred_fallthru
      _
    %v40 = vld [vmem:[#allocation2] sm:$0xff]
    %v41 = vld [vmem:[#allocation2 + $0x8] sm:$0xff]
    %v42 = vmul.f32 %v40, %v40
    %v43 = vmul.f32 %v41, %v41
    %v44 = vld [vmem:[#allocation5] sm:$0xff]
    %v45 = vld [vmem:[#allocation5 + $0x8] sm:$0xff]
    %v46 = vld [vmem:[#allocation5 + $0x10] sm:$0xff]
    %v47 = vld [vmem:[#allocation5 + $0x18] sm:$0xff]
    %v48 = vld [vmem:[#allocation5 + $0x20] sm:$0xff]
    %v49 = vld [vmem:[#allocation5 + $0x28] sm:$0xff]
    %v50 = vld [vmem:[#allocation5 + $0x30] sm:$0xff]
    %v51 = vld [vmem:[#allocation5 + $0x38] sm:$0xff]
    %v52 = vld [vmem:[#allocation5 + $0x40] sm:$0xff]
    %v53 = vld [vmem:[#allocation5 + $0x48] sm:$0xff]
    %v54 = vld [vmem:[#allocation5 + $0x50] sm:$0xff]
    %v55 = vld [vmem:[#allocation5 + $0x58] sm:$0xff]
    %v56 = vld [vmem:[#allocation5 + $0x60] sm:$0xff]
    %v57 = vld [vmem:[#allocation5 + $0x68] sm:$0xff]
    %v58 = vld [vmem:[#allocation5 + $0x70] sm:$0xff]
    %v59 = vld [vmem:[#allocation5 + $0x78] sm:$0xff]
    %60 = vmatprep.subr.mxu0 0.0
    %v61 = vand.u32 %v44, 4294901760
    %62 = vmatpush1.msra.mxu0 %v61
    %63 = vmatprep.subr.mxu0 0.0
    %v64 = vand.u32 %v45, 4294901760
    %65 = vmatpush1.msra.mxu0 %v64
    %66 = vmatprep.subr.mxu0 0.0
    %v67 = vand.u32 %v46, 4294901760
    %68 = vmatpush1.msra.mxu0 %v67
    %69 = vmatprep.subr.mxu0 0.0
    %v70 = vand.u32 %v47, 4294901760
    %71 = vmatpush1.msra.mxu0 %v70
    %72 = vmatprep.subr.mxu0 0.0
    %v73 = vand.u32 %v48, 4294901760
    %74 = vmatpush1.msra.mxu0 %v73
    %75 = vmatprep.subr.mxu0 0.0
    %v76 = vand.u32 %v49, 4294901760
    %77 = vmatpush1.msra.mxu0 %v76
    %78 = vmatprep.subr.mxu0 0.0
    %v79 = vand.u32 %v50, 4294901760
    %80 = vmatpush1.msra.mxu0 %v79
    %81 = vmatprep.subr.mxu0 0.0
    %v82 = vand.u32 %v51, 4294901760
    %83 = vmatpush1.msra.mxu0 %v82
    %84 = vmatprep.subr.mxu0 0.0
    %v85 = vand.u32 %v52, 4294901760
    %86 = vmatpush1.msra.mxu0 %v85
    %87 = vmatprep.subr.mxu0 0.0
    %v88 = vand.u32 %v53, 4294901760
    %89 = vmatpush1.msra.mxu0 %v88
    %90 = vmatprep.subr.mxu0 0.0
    %v91 = vand.u32 %v54, 4294901760
    %92 = vmatpush1.msra.mxu0 %v91
    %93 = vmatprep.subr.mxu0 0.0
    %v94 = vand.u32 %v55, 4294901760
    %95 = vmatpush1.msra.mxu0 %v94
    %96 = vmatprep.subr.mxu0 0.0
    %v97 = vand.u32 %v56, 4294901760
    %98 = vmatpush1.msra.mxu0 %v97
    %99 = vmatprep.subr.mxu0 0.0
    %v100 = vand.u32 %v57, 4294901760
    %101 = vmatpush1.msra.mxu0 %v100
    %102 = vmatprep.subr.mxu0 0.0
    %v103 = vand.u32 %v58, 4294901760
    %104 = vmatpush1.msra.mxu0 %v103
    %105 = vmatprep.subr.mxu0 0.0
    %v106 = vand.u32 %v59, 4294901760
    %107 = vmatpush1.msra.mxu0 %v106
    %108 = vmatprep.subr.mxu0 0.0
    %109 = vmatpush1.msra.mxu0 0.0
    %110 = vmatprep.subr.mxu0 0.0
    %111 = vmatpush1.msra.mxu0 0.0
    %112 = vmatprep.subr.mxu0 0.0
    %113 = vmatpush1.msra.mxu0 0.0
    %114 = vmatprep.subr.mxu0 0.0
    %115 = vmatpush1.msra.mxu0 0.0
    %116 = vmatprep.subr.mxu0 0.0
    %117 = vmatpush1.msra.mxu0 0.0
    %118 = vmatprep.subr.mxu0 0.0
    %119 = vmatpush1.msra.mxu0 0.0
    %120 = vmatprep.subr.mxu0 0.0
    %121 = vmatpush1.msra.mxu0 0.0
    %122 = vmatprep.subr.mxu0 0.0
    %123 = vmatpush1.msra.mxu0 0.0
    %124 = vmatprep.subr.mxu0 0.0
    %125 = vmatpush1.msra.mxu0 0.0
    %126 = vmatprep.subr.mxu0 0.0
    %127 = vmatpush1.msra.mxu0 0.0
    %128 = vmatprep.subr.mxu0 0.0
    %129 = vmatpush1.msra.mxu0 0.0
    %130 = vmatprep.subr.mxu0 0.0
    %131 = vmatpush1.msra.mxu0 0.0
    %132 = vmatprep.subr.mxu0 0.0
    %133 = vmatpush1.msra.mxu0 0.0
    %134 = vmatprep.subr.mxu0 0.0
    %135 = vmatpush1.msra.mxu0 0.0
    %136 = vmatprep.subr.mxu0 0.0
    %137 = vmatpush1.msra.mxu0 0.0
    %138 = vmatprep.subr.mxu0 0.0
    %139 = vmatpush1.msra.mxu0 0.0
    %140 = vmatprep.mubr.f32.mxu0 0.0
    %v141 = vand.u32 %v42, 4294901760
    %v142 = vsub.f32 %v42, %v141
    %v143 = vand.u32 %v142, 4294901760
    %v144 = vsub.f32 %v142, %v143
    %v145 = vand.u32 %v144, 4294901760
    %146 = vmatmul.mubr.f32.gmra.mrb[0].mxu0 %v145
    %v147 = vpop.f32.mrb[0].mxu0
    %v148 = vadd.f32 0.0, %v147
    %v149 = vpop.f32.mrb[0].mxu0
    %150 = vmatprep.mubr.f32.mxu0 0.0
    %v151 = vand.u32 %v43, 4294901760
    %v152 = vsub.f32 %v43, %v151
    %v153 = vand.u32 %v152, 4294901760
    %v154 = vsub.f32 %v152, %v153
    %v155 = vand.u32 %v154, 4294901760
    %156 = vmatmul.mubr.f32.gmra.mrb[0].mxu0 %v155
    %v157 = vpop.f32.mrb[0].mxu0
    %v158 = vadd.f32 0.0, %v157
    %v159 = vpop.f32.mrb[0].mxu0
    %160 = vdwg.mxu0
    %161 = vmatprep.subr.mxu0 0.0
    %v162 = vand.u32 %v44, 4294901760
    %v163 = vsub.f32 %v44, %v162
    %v164 = vand.u32 %v163, 4294901760
    %v165 = vsub.f32 %v163, %v164
    %v166 = vand.u32 %v165, 4294901760
    %167 = vmatpush1.msra.mxu0 %v166
    %168 = vmatprep.subr.mxu0 0.0
    %v169 = vand.u32 %v45, 4294901760
    %v170 = vsub.f32 %v45, %v169
    %v171 = vand.u32 %v170, 4294901760
    %v172 = vsub.f32 %v170, %v171
    %v173 = vand.u32 %v172, 4294901760
    %174 = vmatpush1.msra.mxu0 %v173
    %175 = vmatprep.subr.mxu0 0.0
    %v176 = vand.u32 %v46, 4294901760
    %v177 = vsub.f32 %v46, %v176
    %v178 = vand.u32 %v177, 4294901760
    %v179 = vsub.f32 %v177, %v178
    %v180 = vand.u32 %v179, 4294901760
    %181 = vmatpush1.msra.mxu0 %v180
    %182 = vmatprep.subr.mxu0 0.0
    %v183 = vand.u32 %v47, 4294901760
    %v184 = vsub.f32 %v47, %v183
    %v185 = vand.u32 %v184, 4294901760
    %v186 = vsub.f32 %v184, %v185
    %v187 = vand.u32 %v186, 4294901760
    %188 = vmatpush1.msra.mxu0 %v187
    %189 = vmatprep.subr.mxu0 0.0
    %v190 = vand.u32 %v48, 4294901760
    %v191 = vsub.f32 %v48, %v190
    %v192 = vand.u32 %v191, 4294901760
    %v193 = vsub.f32 %v191, %v192
    %v194 = vand.u32 %v193, 4294901760
    %195 = vmatpush1.msra.mxu0 %v194
    %196 = vmatprep.subr.mxu0 0.0
    %v197 = vand.u32 %v49, 4294901760
    %v198 = vsub.f32 %v49, %v197
    %v199 = vand.u32 %v198, 4294901760
    %v200 = vsub.f32 %v198, %v199
    %v201 = vand.u32 %v200, 4294901760
    %202 = vmatpush1.msra.mxu0 %v201
    %203 = vmatprep.subr.mxu0 0.0
    %v204 = vand.u32 %v50, 4294901760
    %v205 = vsub.f32 %v50, %v204
    %v206 = vand.u32 %v205, 4294901760
    %v207 = vsub.f32 %v205, %v206
    %v208 = vand.u32 %v207, 4294901760
    %209 = vmatpush1.msra.mxu0 %v208
    %210 = vmatprep.subr.mxu0 0.0
    %v211 = vand.u32 %v51, 4294901760
    %v212 = vsub.f32 %v51, %v211
    %v213 = vand.u32 %v212, 4294901760
    %v214 = vsub.f32 %v212, %v213
    %v215 = vand.u32 %v214, 4294901760
    %216 = vmatpush1.msra.mxu0 %v215
    %217 = vmatprep.subr.mxu0 0.0
    %v218 = vand.u32 %v52, 4294901760
    %v219 = vsub.f32 %v52, %v218
    %v220 = vand.u32 %v219, 4294901760
    %v221 = vsub.f32 %v219, %v220
    %v222 = vand.u32 %v221, 4294901760
    %223 = vmatpush1.msra.mxu0 %v222
    %224 = vmatprep.subr.mxu0 0.0
    %v225 = vand.u32 %v53, 4294901760
    %v226 = vsub.f32 %v53, %v225
    %v227 = vand.u32 %v226, 4294901760
    %v228 = vsub.f32 %v226, %v227
    %v229 = vand.u32 %v228, 4294901760
    %230 = vmatpush1.msra.mxu0 %v229
    %231 = vmatprep.subr.mxu0 0.0
    %v232 = vand.u32 %v54, 4294901760
    %v233 = vsub.f32 %v54, %v232
    %v234 = vand.u32 %v233, 4294901760
    %v235 = vsub.f32 %v233, %v234
    %v236 = vand.u32 %v235, 4294901760
    %237 = vmatpush1.msra.mxu0 %v236
    %238 = vmatprep.subr.mxu0 0.0
    %v239 = vand.u32 %v55, 4294901760
    %v240 = vsub.f32 %v55, %v239
    %v241 = vand.u32 %v240, 4294901760
    %v242 = vsub.f32 %v240, %v241
    %v243 = vand.u32 %v242, 4294901760
    %244 = vmatpush1.msra.mxu0 %v243
    %245 = vmatprep.subr.mxu0 0.0
    %v246 = vand.u32 %v56, 4294901760
    %v247 = vsub.f32 %v56, %v246
    %v248 = vand.u32 %v247, 4294901760
    %v249 = vsub.f32 %v247, %v248
    %v250 = vand.u32 %v249, 4294901760
    %251 = vmatpush1.msra.mxu0 %v250
    %252 = vmatprep.subr.mxu0 0.0
    %v253 = vand.u32 %v57, 4294901760
    %v254 = vsub.f32 %v57, %v253
    %v255 = vand.u32 %v254, 4294901760
    %v256 = vsub.f32 %v254, %v255
    %v257 = vand.u32 %v256, 4294901760
    %258 = vmatpush1.msra.mxu0 %v257
    %259 = vmatprep.subr.mxu0 0.0
    %v260 = vand.u32 %v58, 4294901760
    %v261 = vsub.f32 %v58, %v260
    %v262 = vand.u32 %v261, 4294901760
    %v263 = vsub.f32 %v261, %v262
    %v264 = vand.u32 %v263, 4294901760
    %265 = vmatpush1.msra.mxu0 %v264
    %266 = vmatprep.subr.mxu0 0.0
    %v267 = vand.u32 %v59, 4294901760
    %v268 = vsub.f32 %v59, %v267
    %v269 = vand.u32 %v268, 4294901760
    %v270 = vsub.f32 %v268, %v269
    %v271 = vand.u32 %v270, 4294901760
    %272 = vmatpush1.msra.mxu0 %v271
    %273 = vmatprep.subr.mxu0 0.0
    %274 = vmatpush1.msra.mxu0 0.0
    %275 = vmatprep.subr.mxu0 0.0
    %276 = vmatpush1.msra.mxu0 0.0
    %277 = vmatprep.subr.mxu0 0.0
    %278 = vmatpush1.msra.mxu0 0.0
    %279 = vmatprep.subr.mxu0 0.0
    %280 = vmatpush1.msra.mxu0 0.0
    %281 = vmatprep.subr.mxu0 0.0
    %282 = vmatpush1.msra.mxu0 0.0
    %283 = vmatprep.subr.mxu0 0.0
    %284 = vmatpush1.msra.mxu0 0.0
    %285 = vmatprep.subr.mxu0 0.0
    %286 = vmatpush1.msra.mxu0 0.0
    %287 = vmatprep.subr.mxu0 0.0
    %288 = vmatpush1.msra.mxu0 0.0
    %289 = vmatprep.subr.mxu0 0.0
    %290 = vmatpush1.msra.mxu0 0.0
    %291 = vmatprep.subr.mxu0 0.0
    %292 = vmatpush1.msra.mxu0 0.0
    %293 = vmatprep.subr.mxu0 0.0
    %294 = vmatpush1.msra.mxu0 0.0
    %295 = vmatprep.subr.mxu0 0.0
    %296 = vmatpush1.msra.mxu0 0.0
    %297 = vmatprep.subr.mxu0 0.0
    %298 = vmatpush1.msra.mxu0 0.0
    %299 = vmatprep.subr.mxu0 0.0
    %300 = vmatpush1.msra.mxu0 0.0
    %301 = vmatprep.subr.mxu0 0.0
    %302 = vmatpush1.msra.mxu0 0.0
    %303 = vmatprep.subr.mxu0 0.0
    %304 = vmatpush1.msra.mxu0 0.0
    %305 = vmatprep.mubr.f32.mxu0 0.0
    %v306 = vand.u32 %v42, 4294901760
    %307 = vmatmul.mubr.f32.gmra.mrb[0].mxu0 %v306
    %v308 = vpop.f32.mrb[0].mxu0
    %v309 = vadd.f32 %v148, %v308
    %v310 = vpop.f32.mrb[0].mxu0
    %311 = vmatprep.mubr.f32.mxu0 0.0
    %v312 = vand.u32 %v43, 4294901760
    %313 = vmatmul.mubr.f32.gmra.mrb[0].mxu0 %v312
    %v314 = vpop.f32.mrb[0].mxu0
    %v315 = vadd.f32 %v158, %v314
    %v316 = vpop.f32.mrb[0].mxu0
    %317 = vdwg.mxu0
    %318 = vmatprep.subr.mxu0 0.0
    %v319 = vand.u32 %v44, 4294901760
    %v320 = vsub.f32 %v44, %v319
    %321 = vmatpush1.msra.mxu0 %v320
    %322 = vmatprep.subr.mxu0 0.0
    %v323 = vand.u32 %v45, 4294901760
    %v324 = vsub.f32 %v45, %v323
    %325 = vmatpush1.msra.mxu0 %v324
    %326 = vmatprep.subr.mxu0 0.0
    %v327 = vand.u32 %v46, 4294901760
    %v328 = vsub.f32 %v46, %v327
    %329 = vmatpush1.msra.mxu0 %v328
    %330 = vmatprep.subr.mxu0 0.0
    %v331 = vand.u32 %v47, 4294901760
    %v332 = vsub.f32 %v47, %v331
    %333 = vmatpush1.msra.mxu0 %v332
    %334 = vmatprep.subr.mxu0 0.0
    %v335 = vand.u32 %v48, 4294901760
    %v336 = vsub.f32 %v48, %v335
    %337 = vmatpush1.msra.mxu0 %v336
    %338 = vmatprep.subr.mxu0 0.0
    %v339 = vand.u32 %v49, 4294901760
    %v340 = vsub.f32 %v49, %v339
    %341 = vmatpush1.msra.mxu0 %v340
    %342 = vmatprep.subr.mxu0 0.0
    %v343 = vand.u32 %v50, 4294901760
    %v344 = vsub.f32 %v50, %v343
    %345 = vmatpush1.msra.mxu0 %v344
    %346 = vmatprep.subr.mxu0 0.0
    %v347 = vand.u32 %v51, 4294901760
    %v348 = vsub.f32 %v51, %v347
    %349 = vmatpush1.msra.mxu0 %v348
    %350 = vmatprep.subr.mxu0 0.0
    %v351 = vand.u32 %v52, 4294901760
    %v352 = vsub.f32 %v52, %v351
    %353 = vmatpush1.msra.mxu0 %v352
    %354 = vmatprep.subr.mxu0 0.0
    %v355 = vand.u32 %v53, 4294901760
    %v356 = vsub.f32 %v53, %v355
    %357 = vmatpush1.msra.mxu0 %v356
    %358 = vmatprep.subr.mxu0 0.0
    %v359 = vand.u32 %v54, 4294901760
    %v360 = vsub.f32 %v54, %v359
    %361 = vmatpush1.msra.mxu0 %v360
    %362 = vmatprep.subr.mxu0 0.0
    %v363 = vand.u32 %v55, 4294901760
    %v364 = vsub.f32 %v55, %v363
    %365 = vmatpush1.msra.mxu0 %v364
    %366 = vmatprep.subr.mxu0 0.0
    %v367 = vand.u32 %v56, 4294901760
    %v368 = vsub.f32 %v56, %v367
    %369 = vmatpush1.msra.mxu0 %v368
    %370 = vmatprep.subr.mxu0 0.0
    %v371 = vand.u32 %v57, 4294901760
    %v372 = vsub.f32 %v57, %v371
    %373 = vmatpush1.msra.mxu0 %v372
    %374 = vmatprep.subr.mxu0 0.0
    %v375 = vand.u32 %v58, 4294901760
    %v376 = vsub.f32 %v58, %v375
    %377 = vmatpush1.msra.mxu0 %v376
    %378 = vmatprep.subr.mxu0 0.0
    %v379 = vand.u32 %v59, 4294901760
    %v380 = vsub.f32 %v59, %v379
    %381 = vmatpush1.msra.mxu0 %v380
    %382 = vmatprep.subr.mxu0 0.0
    %383 = vmatpush1.msra.mxu0 0.0
    %384 = vmatprep.subr.mxu0 0.0
    %385 = vmatpush1.msra.mxu0 0.0
    %386 = vmatprep.subr.mxu0 0.0
    %387 = vmatpush1.msra.mxu0 0.0
    %388 = vmatprep.subr.mxu0 0.0
    %389 = vmatpush1.msra.mxu0 0.0
    %390 = vmatprep.subr.mxu0 0.0
    %391 = vmatpush1.msra.mxu0 0.0
    %392 = vmatprep.subr.mxu0 0.0
    %393 = vmatpush1.msra.mxu0 0.0
    %394 = vmatprep.subr.mxu0 0.0
    %395 = vmatpush1.msra.mxu0 0.0
    %396 = vmatprep.subr.mxu0 0.0
    %397 = vmatpush1.msra.mxu0 0.0
    %398 = vmatprep.subr.mxu0 0.0
    %399 = vmatpush1.msra.mxu0 0.0
    %400 = vmatprep.subr.mxu0 0.0
    %401 = vmatpush1.msra.mxu0 0.0
    %402 = vmatprep.subr.mxu0 0.0
    %403 = vmatpush1.msra.mxu0 0.0
    %404 = vmatprep.subr.mxu0 0.0
    %405 = vmatpush1.msra.mxu0 0.0
    %406 = vmatprep.subr.mxu0 0.0
    %407 = vmatpush1.msra.mxu0 0.0
    %408 = vmatprep.subr.mxu0 0.0
    %409 = vmatpush1.msra.mxu0 0.0
    %410 = vmatprep.subr.mxu0 0.0
    %411 = vmatpush1.msra.mxu0 0.0
    %412 = vmatprep.subr.mxu0 0.0
    %413 = vmatpush1.msra.mxu0 0.0
    %414 = vmatprep.mubr.f32.mxu0 0.0
    %v415 = vand.u32 %v42, 4294901760
    %v416 = vsub.f32 %v42, %v415
    %417 = vmatmul.mubr.f32.gmra.mrb[0].mxu0 %v416
    %v418 = vpop.f32.mrb[0].mxu0
    %v419 = vadd.f32 %v309, %v418
    %v420 = vpop.f32.mrb[0].mxu0
    %421 = vmatprep.mubr.f32.mxu0 0.0
    %v422 = vand.u32 %v43, 4294901760
    %v423 = vsub.f32 %v43, %v422
    %424 = vmatmul.mubr.f32.gmra.mrb[0].mxu0 %v423
    %v425 = vpop.f32.mrb[0].mxu0
    %v426 = vadd.f32 %v315, %v425
    %v427 = vpop.f32.mrb[0].mxu0
    %428 = vdwg.mxu0
    %429 = vmatprep.subr.mxu0 0.0
    %v430 = vand.u32 %v44, 4294901760
    %431 = vmatpush1.msra.mxu0 %v430
    %432 = vmatprep.subr.mxu0 0.0
    %v433 = vand.u32 %v45, 4294901760
    %434 = vmatpush1.msra.mxu0 %v433
    %435 = vmatprep.subr.mxu0 0.0
    %v436 = vand.u32 %v46, 4294901760
    %437 = vmatpush1.msra.mxu0 %v436
    %438 = vmatprep.subr.mxu0 0.0
    %v439 = vand.u32 %v47, 4294901760
    %440 = vmatpush1.msra.mxu0 %v439
    %441 = vmatprep.subr.mxu0 0.0
    %v442 = vand.u32 %v48, 4294901760
    %443 = vmatpush1.msra.mxu0 %v442
    %444 = vmatprep.subr.mxu0 0.0
    %v445 = vand.u32 %v49, 4294901760
    %446 = vmatpush1.msra.mxu0 %v445
    %447 = vmatprep.subr.mxu0 0.0
    %v448 = vand.u32 %v50, 4294901760
    %449 = vmatpush1.msra.mxu0 %v448
    %450 = vmatprep.subr.mxu0 0.0
    %v451 = vand.u32 %v51, 4294901760
    %452 = vmatpush1.msra.mxu0 %v451
    %453 = vmatprep.subr.mxu0 0.0
    %v454 = vand.u32 %v52, 4294901760
    %455 = vmatpush1.msra.mxu0 %v454
    %456 = vmatprep.subr.mxu0 0.0
    %v457 = vand.u32 %v53, 4294901760
    %458 = vmatpush1.msra.mxu0 %v457
    %459 = vmatprep.subr.mxu0 0.0
    %v460 = vand.u32 %v54, 4294901760
    %461 = vmatpush1.msra.mxu0 %v460
    %462 = vmatprep.subr.mxu0 0.0
    %v463 = vand.u32 %v55, 4294901760
    %464 = vmatpush1.msra.mxu0 %v463
    %465 = vmatprep.subr.mxu0 0.0
    %v466 = vand.u32 %v56, 4294901760
    %467 = vmatpush1.msra.mxu0 %v466
    %468 = vmatprep.subr.mxu0 0.0
    %v469 = vand.u32 %v57, 4294901760
    %470 = vmatpush1.msra.mxu0 %v469
    %471 = vmatprep.subr.mxu0 0.0
    %v472 = vand.u32 %v58, 4294901760
    %473 = vmatpush1.msra.mxu0 %v472
    %474 = vmatprep.subr.mxu0 0.0
    %v475 = vand.u32 %v59, 4294901760
    %476 = vmatpush1.msra.mxu0 %v475
    %477 = vmatprep.subr.mxu0 0.0
    %478 = vmatpush1.msra.mxu0 0.0
    %479 = vmatprep.subr.mxu0 0.0
    %480 = vmatpush1.msra.mxu0 0.0
    %481 = vmatprep.subr.mxu0 0.0
    %482 = vmatpush1.msra.mxu0 0.0
    %483 = vmatprep.subr.mxu0 0.0
    %484 = vmatpush1.msra.mxu0 0.0
    %485 = vmatprep.subr.mxu0 0.0
    %486 = vmatpush1.msra.mxu0 0.0
    %487 = vmatprep.subr.mxu0 0.0
    %488 = vmatpush1.msra.mxu0 0.0
    %489 = vmatprep.subr.mxu0 0.0
    %490 = vmatpush1.msra.mxu0 0.0
    %491 = vmatprep.subr.mxu0 0.0
    %492 = vmatpush1.msra.mxu0 0.0
    %493 = vmatprep.subr.mxu0 0.0
    %494 = vmatpush1.msra.mxu0 0.0
    %495 = vmatprep.subr.mxu0 0.0
    %496 = vmatpush1.msra.mxu0 0.0
    %497 = vmatprep.subr.mxu0 0.0
    %498 = vmatpush1.msra.mxu0 0.0
    %499 = vmatprep.subr.mxu0 0.0
    %500 = vmatpush1.msra.mxu0 0.0
    %501 = vmatprep.subr.mxu0 0.0
    %502 = vmatpush1.msra.mxu0 0.0
    %503 = vmatprep.subr.mxu0 0.0
    %504 = vmatpush1.msra.mxu0 0.0
    %505 = vmatprep.subr.mxu0 0.0
    %506 = vmatpush1.msra.mxu0 0.0
    %507 = vmatprep.subr.mxu0 0.0
    %508 = vmatpush1.msra.mxu0 0.0
    %509 = vmatprep.mubr.f32.mxu0 0.0
    %v510 = vand.u32 %v42, 4294901760
    %v511 = vsub.f32 %v42, %v510
    %v512 = vand.u32 %v511, 4294901760
    %513 = vmatmul.mubr.f32.gmra.mrb[0].mxu0 %v512
    %v514 = vpop.f32.mrb[0].mxu0
    %v515 = vadd.f32 %v419, %v514
    %v516 = vpop.f32.mrb[0].mxu0
    %517 = vmatprep.mubr.f32.mxu0 0.0
    %v518 = vand.u32 %v43, 4294901760
    %v519 = vsub.f32 %v43, %v518
    %v520 = vand.u32 %v519, 4294901760
    %521 = vmatmul.mubr.f32.gmra.mrb[0].mxu0 %v520
    %v522 = vpop.f32.mrb[0].mxu0
    %v523 = vadd.f32 %v426, %v522
    %v524 = vpop.f32.mrb[0].mxu0
    %525 = vdwg.mxu0
    %526 = vmatprep.subr.mxu0 0.0
    %v527 = vand.u32 %v44, 4294901760
    %v528 = vsub.f32 %v44, %v527
    %v529 = vand.u32 %v528, 4294901760
    %530 = vmatpush1.msra.mxu0 %v529
    %531 = vmatprep.subr.mxu0 0.0
    %v532 = vand.u32 %v45, 4294901760
    %v533 = vsub.f32 %v45, %v532
    %v534 = vand.u32 %v533, 4294901760
    %535 = vmatpush1.msra.mxu0 %v534
    %536 = vmatprep.subr.mxu0 0.0
    %v537 = vand.u32 %v46, 4294901760
    %v538 = vsub.f32 %v46, %v537
    %v539 = vand.u32 %v538, 4294901760
    %540 = vmatpush1.msra.mxu0 %v539
    %541 = vmatprep.subr.mxu0 0.0
    %v542 = vand.u32 %v47, 4294901760
    %v543 = vsub.f32 %v47, %v542
    %v544 = vand.u32 %v543, 4294901760
    %545 = vmatpush1.msra.mxu0 %v544
    %546 = vmatprep.subr.mxu0 0.0
    %v547 = vand.u32 %v48, 4294901760
    %v548 = vsub.f32 %v48, %v547
    %v549 = vand.u32 %v548, 4294901760
    %550 = vmatpush1.msra.mxu0 %v549
    %551 = vmatprep.subr.mxu0 0.0
    %v552 = vand.u32 %v49, 4294901760
    %v553 = vsub.f32 %v49, %v552
    %v554 = vand.u32 %v553, 4294901760
    %555 = vmatpush1.msra.mxu0 %v554
    %556 = vmatprep.subr.mxu0 0.0
    %v557 = vand.u32 %v50, 4294901760
    %v558 = vsub.f32 %v50, %v557
    %v559 = vand.u32 %v558, 4294901760
    %560 = vmatpush1.msra.mxu0 %v559
    %561 = vmatprep.subr.mxu0 0.0
    %v562 = vand.u32 %v51, 4294901760
    %v563 = vsub.f32 %v51, %v562
    %v564 = vand.u32 %v563, 4294901760
    %565 = vmatpush1.msra.mxu0 %v564
    %566 = vmatprep.subr.mxu0 0.0
    %v567 = vand.u32 %v52, 4294901760
    %v568 = vsub.f32 %v52, %v567
    %v569 = vand.u32 %v568, 4294901760
    %570 = vmatpush1.msra.mxu0 %v569
    %571 = vmatprep.subr.mxu0 0.0
    %v572 = vand.u32 %v53, 4294901760
    %v573 = vsub.f32 %v53, %v572
    %v574 = vand.u32 %v573, 4294901760
    %575 = vmatpush1.msra.mxu0 %v574
    %576 = vmatprep.subr.mxu0 0.0
    %v577 = vand.u32 %v54, 4294901760
    %v578 = vsub.f32 %v54, %v577
    %v579 = vand.u32 %v578, 4294901760
    %580 = vmatpush1.msra.mxu0 %v579
    %581 = vmatprep.subr.mxu0 0.0
    %v582 = vand.u32 %v55, 4294901760
    %v583 = vsub.f32 %v55, %v582
    %v584 = vand.u32 %v583, 4294901760
    %585 = vmatpush1.msra.mxu0 %v584
    %586 = vmatprep.subr.mxu0 0.0
    %v587 = vand.u32 %v56, 4294901760
    %v588 = vsub.f32 %v56, %v587
    %v589 = vand.u32 %v588, 4294901760
    %590 = vmatpush1.msra.mxu0 %v589
    %591 = vmatprep.subr.mxu0 0.0
    %v592 = vand.u32 %v57, 4294901760
    %v593 = vsub.f32 %v57, %v592
    %v594 = vand.u32 %v593, 4294901760
    %595 = vmatpush1.msra.mxu0 %v594
    %596 = vmatprep.subr.mxu0 0.0
    %v597 = vand.u32 %v58, 4294901760
    %v598 = vsub.f32 %v58, %v597
    %v599 = vand.u32 %v598, 4294901760
    %600 = vmatpush1.msra.mxu0 %v599
    %601 = vmatprep.subr.mxu0 0.0
    %v602 = vand.u32 %v59, 4294901760
    %v603 = vsub.f32 %v59, %v602
    %v604 = vand.u32 %v603, 4294901760
    %605 = vmatpush1.msra.mxu0 %v604
    %606 = vmatprep.subr.mxu0 0.0
    %607 = vmatpush1.msra.mxu0 0.0
    %608 = vmatprep.subr.mxu0 0.0
    %609 = vmatpush1.msra.mxu0 0.0
    %610 = vmatprep.subr.mxu0 0.0
    %611 = vmatpush1.msra.mxu0 0.0
    %612 = vmatprep.subr.mxu0 0.0
    %613 = vmatpush1.msra.mxu0 0.0
    %614 = vmatprep.subr.mxu0 0.0
    %615 = vmatpush1.msra.mxu0 0.0
    %616 = vmatprep.subr.mxu0 0.0
    %617 = vmatpush1.msra.mxu0 0.0
    %618 = vmatprep.subr.mxu0 0.0
    %619 = vmatpush1.msra.mxu0 0.0
    %620 = vmatprep.subr.mxu0 0.0
    %621 = vmatpush1.msra.mxu0 0.0
    %622 = vmatprep.subr.mxu0 0.0
    %623 = vmatpush1.msra.mxu0 0.0
    %624 = vmatprep.subr.mxu0 0.0
    %625 = vmatpush1.msra.mxu0 0.0
    %626 = vmatprep.subr.mxu0 0.0
    %627 = vmatpush1.msra.mxu0 0.0
    %628 = vmatprep.subr.mxu0 0.0
    %629 = vmatpush1.msra.mxu0 0.0
    %630 = vmatprep.subr.mxu0 0.0
    %631 = vmatpush1.msra.mxu0 0.0
    %632 = vmatprep.subr.mxu0 0.0
    %633 = vmatpush1.msra.mxu0 0.0
    %634 = vmatprep.subr.mxu0 0.0
    %635 = vmatpush1.msra.mxu0 0.0
    %636 = vmatprep.subr.mxu0 0.0
    %637 = vmatpush1.msra.mxu0 0.0
    %638 = vmatprep.mubr.f32.mxu0 0.0
    %v639 = vand.u32 %v42, 4294901760
    %640 = vmatmul.mubr.f32.gmra.mrb[0].mxu0 %v639
    %v641 = vpop.f32.mrb[0].mxu0
    %v642 = vadd.f32 %v515, %v641
    %v643 = vpop.f32.mrb[0].mxu0
    %644 = vmatprep.mubr.f32.mxu0 0.0
    %v645 = vand.u32 %v43, 4294901760
    %646 = vmatmul.mubr.f32.gmra.mrb[0].mxu0 %v645
    %v647 = vpop.f32.mrb[0].mxu0
    %v648 = vadd.f32 %v523, %v647
    %v649 = vpop.f32.mrb[0].mxu0
    %650 = vdwg.mxu0
    %651 = vmatprep.subr.mxu0 0.0
    %v652 = vand.u32 %v44, 4294901760
    %653 = vmatpush1.msra.mxu0 %v652
    %654 = vmatprep.subr.mxu0 0.0
    %v655 = vand.u32 %v45, 4294901760
    %656 = vmatpush1.msra.mxu0 %v655
    %657 = vmatprep.subr.mxu0 0.0
    %v658 = vand.u32 %v46, 4294901760
    %659 = vmatpush1.msra.mxu0 %v658
    %660 = vmatprep.subr.mxu0 0.0
    %v661 = vand.u32 %v47, 4294901760
    %662 = vmatpush1.msra.mxu0 %v661
    %663 = vmatprep.subr.mxu0 0.0
    %v664 = vand.u32 %v48, 4294901760
    %665 = vmatpush1.msra.mxu0 %v664
    %666 = vmatprep.subr.mxu0 0.0
    %v667 = vand.u32 %v49, 4294901760
    %668 = vmatpush1.msra.mxu0 %v667
    %669 = vmatprep.subr.mxu0 0.0
    %v670 = vand.u32 %v50, 4294901760
    %671 = vmatpush1.msra.mxu0 %v670
    %672 = vmatprep.subr.mxu0 0.0
    %v673 = vand.u32 %v51, 4294901760
    %674 = vmatpush1.msra.mxu0 %v673
    %675 = vmatprep.subr.mxu0 0.0
    %v676 = vand.u32 %v52, 4294901760
    %677 = vmatpush1.msra.mxu0 %v676
    %678 = vmatprep.subr.mxu0 0.0
    %v679 = vand.u32 %v53, 4294901760
    %680 = vmatpush1.msra.mxu0 %v679
    %681 = vmatprep.subr.mxu0 0.0
    %v682 = vand.u32 %v54, 4294901760
    %683 = vmatpush1.msra.mxu0 %v682
    %684 = vmatprep.subr.mxu0 0.0
    %v685 = vand.u32 %v55, 4294901760
    %686 = vmatpush1.msra.mxu0 %v685
    %687 = vmatprep.subr.mxu0 0.0
    %v688 = vand.u32 %v56, 4294901760
    %689 = vmatpush1.msra.mxu0 %v688
    %690 = vmatprep.subr.mxu0 0.0
    %v691 = vand.u32 %v57, 4294901760
    %692 = vmatpush1.msra.mxu0 %v691
    %693 = vmatprep.subr.mxu0 0.0
    %v694 = vand.u32 %v58, 4294901760
    %695 = vmatpush1.msra.mxu0 %v694
    %696 = vmatprep.subr.mxu0 0.0
    %v697 = vand.u32 %v59, 4294901760
    %698 = vmatpush1.msra.mxu0 %v697
    %699 = vmatprep.subr.mxu0 0.0
    %700 = vmatpush1.msra.mxu0 0.0
    %701 = vmatprep.subr.mxu0 0.0
    %702 = vmatpush1.msra.mxu0 0.0
    %703 = vmatprep.subr.mxu0 0.0
    %704 = vmatpush1.msra.mxu0 0.0
    %705 = vmatprep.subr.mxu0 0.0
    %706 = vmatpush1.msra.mxu0 0.0
    %707 = vmatprep.subr.mxu0 0.0
    %708 = vmatpush1.msra.mxu0 0.0
    %709 = vmatprep.subr.mxu0 0.0
    %710 = vmatpush1.msra.mxu0 0.0
    %711 = vmatprep.subr.mxu0 0.0
    %712 = vmatpush1.msra.mxu0 0.0
    %713 = vmatprep.subr.mxu0 0.0
    %714 = vmatpush1.msra.mxu0 0.0
    %715 = vmatprep.subr.mxu0 0.0
    %716 = vmatpush1.msra.mxu0 0.0
    %717 = vmatprep.subr.mxu0 0.0
    %718 = vmatpush1.msra.mxu0 0.0
    %719 = vmatprep.subr.mxu0 0.0
    %720 = vmatpush1.msra.mxu0 0.0
    %721 = vmatprep.subr.mxu0 0.0
    %722 = vmatpush1.msra.mxu0 0.0
    %723 = vmatprep.subr.mxu0 0.0
    %724 = vmatpush1.msra.mxu0 0.0
    %725 = vmatprep.subr.mxu0 0.0
    %726 = vmatpush1.msra.mxu0 0.0
    %727 = vmatprep.subr.mxu0 0.0
    %728 = vmatpush1.msra.mxu0 0.0
    %729 = vmatprep.subr.mxu0 0.0
    %730 = vmatpush1.msra.mxu0 0.0
    %731 = vmatprep.mubr.f32.mxu0 0.0
    %v732 = vand.u32 %v42, 4294901760
    %733 = vmatmul.mubr.f32.gmra.mrb[0].mxu0 %v732
    %v734 = vpop.f32.mrb[0].mxu0
    %v735 = vadd.f32 %v642, %v734
    %v736 = vpop.f32.mrb[0].mxu0
    %737 = vmatprep.mubr.f32.mxu0 0.0
    %v738 = vand.u32 %v43, 4294901760
    %739 = vmatmul.mubr.f32.gmra.mrb[0].mxu0 %v738
    %v740 = vpop.f32.mrb[0].mxu0
    %v741 = vadd.f32 %v648, %v740
    %v742 = vpop.f32.mrb[0].mxu0
    %743 = vdwg.mxu0
    %v744 = vmul.f32 %v735, 0.25
    %v745 = vmul.f32 %v741, 0.25
    %v746 = vadd.f32 %v744, 1e-05
    %v747 = vadd.f32 %v745, 1e-05
    %v748 = vrsqrt.pop %v746
    %v749 = vrsqrt.pop %v747
    %v750 = vmul.f32 %v40, %v748
    %v751 = vmul.f32 %v41, %v749
    %752 = vst [vmem:[#allocation7] sm:$0xff] %v750
    %753 = vst [vmem:[#allocation7 + $0x8] sm:$0xff] %v751
    // Predicated region
    $region18: #{tpu_custom_call.1} parent=1 // pred_check
      _
    $region19: #{tpu_custom_call.1} parent=1 // pred_check_branch
      %755 = sbr.rel (0) target = $region21
    $region20: #{tpu_custom_call.1} parent=1 // pred_region
      %s757 = ssub.s32 256, 256
      %758 = vsyncadd [#allocation4], %s757
      %s759 = sshll.u32 [#allocation7], 4
      %s760 = int_to_ptr.vmem [resolvable:$true] %s759
      %765 = dma.vmem_to_hbm [thread:$0]  %s760, 256, %s2, [#allocation4], 128, 128, 8
    $region21: #{tpu_custom_call.1} parent=1 // pred_fallthru
      _
    // Predicated region
    $region22: #{tpu_custom_call.1} parent=1 // pred_check
      _
    $region23: #{tpu_custom_call.1} parent=1 // pred_check_branch
      %767 = sbr.rel (0) target = $region25
    $region24: #{tpu_custom_call.1} parent=1 // pred_region
      %768 = dma.done [#allocation4], 256
    $region25: #{tpu_custom_call.1} parent=1 // pred_fallthru
      _
    %769 = vsyncpa [#allocation3], 1
    %770 = vsyncpa [#allocation6], 1
    %771 = vsyncpa [#allocation4], 1

</llo_original>
